<compile_context>
chip_gen: v6e
topology: v6e:2x2x1
jax: 0.10.0
libtpu: 0.0.40
codegen_flags: <defaults>
</compile_context>

<pallas_src>
import functools

import jax
import jax.numpy as jnp
from jax.experimental import pallas as pl
from jax.experimental.pallas import tpu as pltpu

DIM = 768          # in_size == out_size == dim in the PyTorch module
NUM_THETAS = 64    # EctConfig(num_thetas=64)
BUMP_STEPS = 64    # EctConfig(bump_steps=64) (compute_ect uses bump_steps=num_thetas)
RADIUS = 1.1       # dect EctConfig default: lin = linspace(-r, r, bump_steps)
SCALE = 100.0      # dect compute_ecc default sigmoid sharpness
N_POINTS = 16      # small example point cloud (even, so N*T is a multiple of 128)


def _ect_kernel(x_ref, m_ref, bv_ref, o_ref, snh_ref, *, use_bf16_eup):
    """Fused: node heights (x @ (W^T v) + b v) -> sigmoid-bump ECT -> normalize."""
    eup_dtype = jnp.bfloat16 if use_bf16_eup else jnp.float32

    # Node heights nh = x @ M + bv.  bf16 x bf16 on the MXU, f32 accumulation;
    # the orthogonal Linear weight never enters the kernel (folded into M).
    nh = jax.lax.dot_general(
        x_ref[...], m_ref[...],
        dimension_numbers=(((1,), (0,)), ((), ())),
        preferred_element_type=jnp.float32) + bv_ref[...]          # (N, T) f32

    n, t = nh.shape
    pack = 128 // t                  # points per 128-lane row (2 for T=64)
    n_rows = n // pack               # lane-packed rows

    # sigmoid(z) = 0.5 + 0.5*tanh(z/2): pre-scale by SCALE/2 once (hoisted out of
    # the loop) and lane-pack the scaled node heights into (n_rows, 128) so every
    # EUP push / VALU op is fully lane-filled.  Point p = j*n_rows + i lands in
    # row i, lane block j; per-theta sums are recovered after the loop by adding
    # the `pack` lane blocks.
    s_nh = (0.5 * SCALE) * nh                                       # (N, T) f32
    blocks = [s_nh[j * n_rows:(j + 1) * n_rows, :] for j in range(pack)]
    snh_ref[...] = blocks[0] if pack == 1 else jnp.concatenate(blocks, axis=1)

    # Filtration levels linspace(-R, R, BUMP_STEPS), generated in-kernel, scaled.
    steps = jax.lax.broadcasted_iota(jnp.int32, (BUMP_STEPS, 1), 0).astype(jnp.float32)
    lin = steps * (2.0 * RADIUS / (BUMP_STEPS - 1)) - RADIUS        # (B, 1)
    slin = ((0.5 * SCALE) * lin).astype(eup_dtype)

    # ECT accumulation: acc[b, l] += tanh(slin[b] - snh[row, l]) over packed rows.
    # Bounded, unrolled fori_loop reading rows from the scratch ref keeps only
    # (B, 128) tiles live and scales to larger point clouds.
    def body(i, acc):
        row = snh_ref[pl.ds(i, 1), :].astype(eup_dtype)             # (1, 128)
        return acc + jnp.tanh(slin - row).astype(jnp.float32)

    acc = jax.lax.fori_loop(
        0, n_rows, body, jnp.zeros((BUMP_STEPS, 128), jnp.float32), unroll=True)

    # Un-pack the theta lane blocks and finish the sigmoid affine:
    # ect = sum_p sigmoid(.) = 0.5*N + 0.5 * sum_p tanh(.).
    comb = acc[:, 0:t]
    for j in range(1, pack):                                        # static
        comb = comb + acc[:, j * t:(j + 1) * t]
    ect = 0.5 * comb + (0.5 * n)

    # normalized=True: divide by the per-graph max over (bump_steps, num_thetas).
    o_ref[...] = ect * (1.0 / jnp.max(ect))


def prepare_params(w, b, v):
    """One-time fold of the (frozen) orthogonal Linear into the ECT directions.

    w: (D, D) PyTorch (out, in) layout, orthogonal.  b: (D,).  v: (D, T) unit cols.
    Returns M = W^T @ v (bf16, streamed to the MXU) and bv = b @ v (f32).
    Exact: (x @ W^T + b) @ v == x @ (W^T @ v) + b @ v.
    """
    w = jnp.asarray(w, jnp.float32)
    b = jnp.asarray(b, jnp.float32)
    v = jnp.asarray(v, jnp.float32)
    m = (w.T @ v).astype(jnp.bfloat16)                  # (D, T)
    bv = (b @ v).reshape(1, -1).astype(jnp.float32)     # (1, T)
    return m, bv


def orthogonal_model_forward(x, m, bv):
    """x:(N,D) point cloud (bf16 ok); m:(D,T) bf16 = W^T@v; bv:(1,T) f32 = b@v.

    Returns the (BUMP_STEPS, T) normalized ECT (== res[0] of the PyTorch module).
    """
    n, d = x.shape
    t = m.shape[1]
    assert 128 % t == 0, "num_thetas must divide 128 for lane packing"
    pack = 128 // t
    assert n % pack == 0, "point count must be a multiple of 128 // num_thetas"
    # TODO(synk): ragged N (odd point counts) would need a +inf-height pad row.
    n_rows = n // pack

    x = jnp.asarray(x, jnp.bfloat16)   # 24 KiB; the W/v fold stays out of this path

    # v5e's EUP/VPU have no bf16 path; run the tanh tiles in bf16 only on v6e/v7x.
    kind = jax.devices()[0].device_kind.lower()
    use_bf16_eup = ("v6" in kind) or ("v7" in kind) or ("7x" in kind)

    kernel = functools.partial(_ect_kernel, use_bf16_eup=use_bf16_eup)

    return pl.pallas_call(
        kernel,
        out_shape=jax.ShapeDtypeStruct((BUMP_STEPS, t), jnp.float32),
        grid=(1,),                                        # single VMEM-resident step
        in_specs=[
            pl.BlockSpec((n, d), lambda i: (0, 0)),       # x  (bf16)
            pl.BlockSpec((d, t), lambda i: (0, 0)),       # M  (bf16)
            pl.BlockSpec((1, t), lambda i: (0, 0)),       # bv (f32)
        ],
        out_specs=pl.BlockSpec((BUMP_STEPS, t), lambda i: (0, 0)),
        scratch_shapes=[pltpu.VMEM((n_rows, 128), jnp.float32)],
        # Single graph -> single step.  If batching graphs later, add a leading
        # "parallel" grid axis so v7x's two TensorCores split the work.
        compiler_params=pltpu.CompilerParams(
            dimension_semantics=("arbitrary",)),
    )(x, m, bv)


def _reference(x, w, b, v):
    y = x @ w.T + b
    nh = y @ v
    lin = jnp.linspace(-RADIUS, RADIUS, BUMP_STEPS, dtype=jnp.float32).reshape(-1, 1, 1)
    ect = jax.nn.sigmoid(SCALE * (lin - nh[None])).sum(axis=1)
    return ect / jnp.max(ect)


if __name__ == "__main__":
    key = jax.random.PRNGKey(0)
    kx, kw, kb, kv = jax.random.split(key, 4)

    # Deterministic orthogonal weight standing in for the geotorch-constrained
    # Linear weight (geotorch.orthogonal parametrization -> any orthogonal matrix).
    # TODO(synk): geotorch's manifold re-parametrization itself has no Pallas
    # equivalent; we materialize a concrete orthogonal matrix instead.
    w, _ = jnp.linalg.qr(jax.random.normal(kw, (DIM, DIM), dtype=jnp.float32))
    w = w.astype(jnp.float32)
    b = (jax.random.uniform(kb, (DIM,), jnp.float32, -1.0, 1.0)
         / jnp.sqrt(jnp.float32(DIM)))

    # Deterministic ECT directions (dect samples torch.randn then normalizes columns).
    v = jax.random.normal(kv, (DIM, NUM_THETAS), dtype=jnp.float32)
    v = v / jnp.linalg.norm(v, axis=0, keepdims=True)

    # Small point cloud, scaled so node heights land inside the [-RADIUS, RADIUS] window.
    x = jax.random.normal(kx, (N_POINTS, DIM), dtype=jnp.float32) / jnp.sqrt(
        jnp.float32(DIM))

    # One-time parameter prep (inference: W, b, v frozen between calls).
    m, bv = prepare_params(w, b, v)
    x_bf = x.astype(jnp.bfloat16)

    out = jax.block_until_ready(orthogonal_model_forward(x_bf, m, bv))
    ref = _reference(x, w, b, v)

    assert out.shape == (BUMP_STEPS, NUM_THETAS)
    assert out.dtype == jnp.float32
    assert bool(jnp.all(jnp.isfinite(out)))
    assert bool(jnp.allclose(out, ref, atol=1e-2, rtol=1e-2))
    print("KERNEL_OK")
</pallas_src>

<mosaic_0001>
module attributes {stable_mosaic.version = 11 : i64} {
  func.func @_ect_kernel(%arg0: i32, %arg1: memref<16x768xbf16, #tpu.memory_space<vmem>>, %arg2: memref<768x64xbf16, #tpu.memory_space<vmem>>, %arg3: memref<1x64xf32, #tpu.memory_space<vmem>>, %arg4: memref<64x64xf32, #tpu.memory_space<vmem>>, %arg5: memref<8x128xf32, #tpu.memory_space<vmem>>) attributes {dimension_semantics = [#tpu.dimension_semantics<arbitrary>], iteration_bounds = array<i64: 1>, scalar_prefetch = 0 : i64, scratch_operands = 1 : i64, tpu.core_type = #tpu.core_type<tc>, window_params = [{pipeline_mode = #tpu.pipeline_mode<synchronous>, transform_indices = @transform_0, window_bounds = array<i64: 16, 768>}, {pipeline_mode = #tpu.pipeline_mode<synchronous>, transform_indices = @transform_1, window_bounds = array<i64: 768, 64>}, {pipeline_mode = #tpu.pipeline_mode<synchronous>, transform_indices = @transform_2, window_bounds = array<i64: 1, 64>}, {pipeline_mode = #tpu.pipeline_mode<synchronous>, transform_indices = @transform_3, window_bounds = array<i64: 64, 64>}]} {
    %c0 = arith.constant 0 : index
    %c0_0 = arith.constant 0 : index
    %0 = vector.load %arg1[%c0, %c0_0] : memref<16x768xbf16, #tpu.memory_space<vmem>>, vector<16x768xbf16>
    %c0_1 = arith.constant 0 : index
    %c0_2 = arith.constant 0 : index
    %1 = vector.load %arg2[%c0_1, %c0_2] : memref<768x64xbf16, #tpu.memory_space<vmem>>, vector<768x64xbf16>
    %cst = arith.constant dense<0.000000e+00> : vector<16x64xf32>
    %2 = tpu.matmul %0, %1, %cst {dimension_numbers = #tpu.dot_dimension_numbers<[1], [0], [0], [1], [0, 0, 1, 1], [], []>} : vector<16x768xbf16>, vector<768x64xbf16>, vector<16x64xf32> -> vector<16x64xf32>
    %c0_3 = arith.constant 0 : index
    %c0_4 = arith.constant 0 : index
    %3 = vector.load %arg3[%c0_3, %c0_4] : memref<1x64xf32, #tpu.memory_space<vmem>>, vector<1x64xf32>
    %4 = vector.broadcast %3 : vector<1x64xf32> to vector<16x64xf32>
    %5 = arith.addf %2, %4 : vector<16x64xf32>
    %cst_5 = arith.constant 5.000000e+01 : f32
    %6 = vector.broadcast %cst_5 : f32 to vector<16x64xf32>
    %7 = arith.mulf %6, %5 : vector<16x64xf32>
    %8 = vector.extract_strided_slice %7 {offsets = [0, 0], sizes = [8, 64], strides = [1, 1]} : vector<16x64xf32> to vector<8x64xf32>
    %9 = vector.extract_strided_slice %7 {offsets = [8, 0], sizes = [8, 64], strides = [1, 1]} : vector<16x64xf32> to vector<8x64xf32>
    %10 = tpu.concatenate %8, %9 in 1 : vector<8x64xf32>, vector<8x64xf32> -> vector<8x128xf32>
    %c0_6 = arith.constant 0 : index
    %c0_7 = arith.constant 0 : index
    %11 = vector.load %arg5[%c0_6, %c0_7] : memref<8x128xf32, #tpu.memory_space<vmem>>, vector<8x128xf32>
    tpu.vector_store %arg5[%c0_6, %c0_7], %10 {strides = array<i32>} : memref<8x128xf32, #tpu.memory_space<vmem>>, vector<8x128xf32>,
    %12 = tpu.iota {dimensions = array<i32: 0>} : vector<64x1xi32>
    %13 = arith.sitofp %12 : vector<64x1xi32> to vector<64x1xf32>
    %cst_8 = arith.constant 0.0349206366 : f32
    %14 = vector.broadcast %cst_8 : f32 to vector<64x1xf32>
    %15 = arith.mulf %13, %14 : vector<64x1xf32>
    %cst_9 = arith.constant 1.100000e+00 : f32
    %16 = vector.broadcast %cst_9 : f32 to vector<64x1xf32>
    %17 = arith.subf %15, %16 : vector<64x1xf32>
    %cst_10 = arith.constant 5.000000e+01 : f32
    %18 = vector.broadcast %cst_10 : f32 to vector<64x1xf32>
    %19 = arith.mulf %18, %17 : vector<64x1xf32>
    %cst_11 = arith.constant 0.000000e+00 : f32
    %20 = vector.broadcast %cst_11 : f32 to vector<64x128xf32>
    %c0_i32 = arith.constant 0 : i32
    %21 = arith.index_cast %c0_i32 : i32 to index
    %c0_12 = arith.constant 0 : index
    %22 = vector.load %arg5[%21, %c0_12] : memref<8x128xf32, #tpu.memory_space<vmem>>, vector<1x128xf32>
    %23 = vector.broadcast %19 : vector<64x1xf32> to vector<64x128xf32>
    %24 = vector.broadcast %22 : vector<1x128xf32> to vector<64x128xf32>
    %25 = arith.subf %23, %24 : vector<64x128xf32>
    %26 = math.tanh %25 : vector<64x128xf32>
    %27 = arith.addf %20, %26 : vector<64x128xf32>
    %c1_i32 = arith.constant 1 : i32
    %28 = arith.index_cast %c1_i32 : i32 to index
    %c0_13 = arith.constant 0 : index
    %29 = vector.load %arg5[%28, %c0_13] : memref<8x128xf32, #tpu.memory_space<vmem>>, vector<1x128xf32>
    %30 = vector.broadcast %19 : vector<64x1xf32> to vector<64x128xf32>
    %31 = vector.broadcast %29 : vector<1x128xf32> to vector<64x128xf32>
    %32 = arith.subf %30, %31 : vector<64x128xf32>
    %33 = math.tanh %32 : vector<64x128xf32>
    %34 = arith.addf %27, %33 : vector<64x128xf32>
    %c2_i32 = arith.constant 2 : i32
    %35 = arith.index_cast %c2_i32 : i32 to index
    %c0_14 = arith.constant 0 : index
    %36 = vector.load %arg5[%35, %c0_14] : memref<8x128xf32, #tpu.memory_space<vmem>>, vector<1x128xf32>
    %37 = vector.broadcast %19 : vector<64x1xf32> to vector<64x128xf32>
    %38 = vector.broadcast %36 : vector<1x128xf32> to vector<64x128xf32>
    %39 = arith.subf %37, %38 : vector<64x128xf32>
    %40 = math.tanh %39 : vector<64x128xf32>
    %41 = arith.addf %34, %40 : vector<64x128xf32>
    %c3_i32 = arith.constant 3 : i32
    %42 = arith.index_cast %c3_i32 : i32 to index
    %c0_15 = arith.constant 0 : index
    %43 = vector.load %arg5[%42, %c0_15] : memref<8x128xf32, #tpu.memory_space<vmem>>, vector<1x128xf32>
    %44 = vector.broadcast %19 : vector<64x1xf32> to vector<64x128xf32>
    %45 = vector.broadcast %43 : vector<1x128xf32> to vector<64x128xf32>
    %46 = arith.subf %44, %45 : vector<64x128xf32>
    %47 = math.tanh %46 : vector<64x128xf32>
    %48 = arith.addf %41, %47 : vector<64x128xf32>
    %c4_i32 = arith.constant 4 : i32
    %49 = arith.index_cast %c4_i32 : i32 to index
    %c0_16 = arith.constant 0 : index
    %50 = vector.load %arg5[%49, %c0_16] : memref<8x128xf32, #tpu.memory_space<vmem>>, vector<1x128xf32>
    %51 = vector.broadcast %19 : vector<64x1xf32> to vector<64x128xf32>
    %52 = vector.broadcast %50 : vector<1x128xf32> to vector<64x128xf32>
    %53 = arith.subf %51, %52 : vector<64x128xf32>
    %54 = math.tanh %53 : vector<64x128xf32>
    %55 = arith.addf %48, %54 : vector<64x128xf32>
    %c5_i32 = arith.constant 5 : i32
    %56 = arith.index_cast %c5_i32 : i32 to index
    %c0_17 = arith.constant 0 : index
    %57 = vector.load %arg5[%56, %c0_17] : memref<8x128xf32, #tpu.memory_space<vmem>>, vector<1x128xf32>
    %58 = vector.broadcast %19 : vector<64x1xf32> to vector<64x128xf32>
    %59 = vector.broadcast %57 : vector<1x128xf32> to vector<64x128xf32>
    %60 = arith.subf %58, %59 : vector<64x128xf32>
    %61 = math.tanh %60 : vector<64x128xf32>
    %62 = arith.addf %55, %61 : vector<64x128xf32>
    %c6_i32 = arith.constant 6 : i32
    %63 = arith.index_cast %c6_i32 : i32 to index
    %c0_18 = arith.constant 0 : index
    %64 = vector.load %arg5[%63, %c0_18] : memref<8x128xf32, #tpu.memory_space<vmem>>, vector<1x128xf32>
    %65 = vector.broadcast %19 : vector<64x1xf32> to vector<64x128xf32>
    %66 = vector.broadcast %64 : vector<1x128xf32> to vector<64x128xf32>
    %67 = arith.subf %65, %66 : vector<64x128xf32>
    %68 = math.tanh %67 : vector<64x128xf32>
    %69 = arith.addf %62, %68 : vector<64x128xf32>
    %c7_i32 = arith.constant 7 : i32
    %70 = arith.index_cast %c7_i32 : i32 to index
    %c0_19 = arith.constant 0 : index
    %71 = vector.load %arg5[%70, %c0_19] : memref<8x128xf32, #tpu.memory_space<vmem>>, vector<1x128xf32>
    %72 = vector.broadcast %19 : vector<64x1xf32> to vector<64x128xf32>
    %73 = vector.broadcast %71 : vector<1x128xf32> to vector<64x128xf32>
    %74 = arith.subf %72, %73 : vector<64x128xf32>
    %75 = math.tanh %74 : vector<64x128xf32>
    %76 = arith.addf %69, %75 : vector<64x128xf32>
    %c8_i32 = arith.constant 8 : i32
    %77 = vector.extract_strided_slice %76 {offsets = [0, 0], sizes = [64, 64], strides = [1, 1]} : vector<64x128xf32> to vector<64x64xf32>
    %78 = vector.extract_strided_slice %76 {offsets = [0, 64], sizes = [64, 64], strides = [1, 1]} : vector<64x128xf32> to vector<64x64xf32>
    %79 = arith.addf %77, %78 : vector<64x64xf32>
    %cst_20 = arith.constant 5.000000e-01 : f32
    %80 = vector.broadcast %cst_20 : f32 to vector<64x64xf32>
    %81 = arith.mulf %80, %79 : vector<64x64xf32>
    %cst_21 = arith.constant 8.000000e+00 : f32
    %82 = vector.broadcast %cst_21 : f32 to vector<64x64xf32>
    %83 = arith.addf %81, %82 : vector<64x64xf32>
    %84 = vector.shape_cast %83 : vector<64x64xf32> to vector<1x64x64xf32>
    %cst_22 = arith.constant dense<0xFF800000> : vector<1xf32>
    %85 = vector.multi_reduction <maximumf>, %84, %cst_22 [1, 2] : vector<1x64x64xf32> to vector<1xf32>
    %86 = vector.shape_cast %85 : vector<1xf32> to vector<1x1x1xf32>
    %87 = vector.extract %86[0, 0, 0] : f32 from vector<1x1x1xf32>
    %cst_23 = arith.constant 1.000000e+00 : f32
    %88 = arith.divf %cst_23, %87 : f32
    %89 = vector.broadcast %88 : f32 to vector<64x64xf32>
    %90 = arith.mulf %83, %89 : vector<64x64xf32>
    %c0_24 = arith.constant 0 : index
    %c0_25 = arith.constant 0 : index
    %91 = vector.load %arg4[%c0_24, %c0_25] : memref<64x64xf32, #tpu.memory_space<vmem>>, vector<64x64xf32>
    tpu.vector_store %arg4[%c0_24, %c0_25], %90 {strides = array<i32>} : memref<64x64xf32, #tpu.memory_space<vmem>>, vector<64x64xf32>,
    return
  }
  func.func @transform_0(%arg0: i32) -> (i32, i32) {
    %c0_i32 = arith.constant 0 : i32
    %c0_i32_0 = arith.constant 0 : i32
    %c0_i32_1 = arith.constant 0 : i32
    return %c0_i32, %c0_i32_0 : i32, i32
  }
  func.func @transform_1(%arg0: i32) -> (i32, i32) {
    %c0_i32 = arith.constant 0 : i32
    %c0_i32_0 = arith.constant 0 : i32
    %c0_i32_1 = arith.constant 0 : i32
    return %c0_i32, %c0_i32_0 : i32, i32
  }
  func.func @transform_2(%arg0: i32) -> (i32, i32) {
    %c0_i32 = arith.constant 0 : i32
    %c0_i32_0 = arith.constant 0 : i32
    %c0_i32_1 = arith.constant 0 : i32
    return %c0_i32, %c0_i32_0 : i32, i32
  }
  func.func @transform_3(%arg0: i32) -> (i32, i32) {
    %c0_i32 = arith.constant 0 : i32
    %c0_i32_0 = arith.constant 0 : i32
    %c0_i32_1 = arith.constant 0 : i32
    return %c0_i32, %c0_i32_0 : i32, i32
  }
}

</mosaic_0001>

<llo_original>
// kernel: tpu_custom_call.1
$region0: #{tpu_custom_call.1}
  #allocation0 [shape = 'u32[]', space=smem, size = 0x4, offset = 0x4, fixed_abs, tag = 'smem constant byte address 0x4 - core index']
  #allocation1 [shape = 'u32[144,128]{1,0:T(1,128)}', space=vmem, size = 0x12000, scoped, tag = 'internal scratch']
  #allocation2 [shape = 'f32[8,128]{1,0:T(8,128)}', space=vmem, size = 0x1000, scoped, tag = 'scratch operand']
  %s0 = inlined_call_operand.vmem [shape: bf16[16,768], index: 0, kind: input, shape index: {}]
  %s1 = inlined_call_operand.vmem [shape: bf16[768,64], index: 1, kind: input, shape index: {}]
  %s2 = inlined_call_operand.vmem [shape: f32[1,64], index: 2, kind: input, shape index: {}]
  %s3 = inlined_call_operand.hbm [shape: f32[64,64], index: 3, kind: output, shape index: {}]
  %s4 = sld [smem:[#allocation0]]
  $region22: #{tpu_custom_call.1} parent=0
    _
  %s6 = ssub.s32 1, %s4
  %s7 = scalar_select 0, %s6, %s4
  $region1: #{tpu_custom_call.1} parent=0
    #allocation3 [shape = 'u8[32768]{0}', space=vmem, size = 0x8000, scoped, tag = 'output window, operand 0, single buffered']
    #allocation4 [shape = 's32[1]{0}', space=sflag, size = 0x4, scoped, tag = 'scoped memory for tpu_custom_call.1']
    %8 = vsyncpa [#allocation4], 0
    // Predicated region
    $region2: #{tpu_custom_call.1} parent=1 // pred_check
      _
    $region3: #{tpu_custom_call.1} parent=1 // pred_check_branch
      %10 = sbr.rel (0) target = $region5
    $region4: #{tpu_custom_call.1} parent=1 // pred_region
      _
    $region5: #{tpu_custom_call.1} parent=1 // pred_fallthru
      _
    // Predicated region
    $region6: #{tpu_custom_call.1} parent=1 // pred_check
      _
    $region7: #{tpu_custom_call.1} parent=1 // pred_check_branch
      %12 = sbr.rel (0) target = $region9
    $region8: #{tpu_custom_call.1} parent=1 // pred_region
      _
    $region9: #{tpu_custom_call.1} parent=1 // pred_fallthru
      _
    // Predicated region
    $region10: #{tpu_custom_call.1} parent=1 // pred_check
      _
    $region11: #{tpu_custom_call.1} parent=1 // pred_check_branch
      %14 = sbr.rel (0) target = $region13
    $region12: #{tpu_custom_call.1} parent=1 // pred_region
      _
    $region13: #{tpu_custom_call.1} parent=1 // pred_fallthru
      _
    %v16 = vld [vmem:[%s0] sm:$0xff]
    %v17 = vld [vmem:[%s0 + $0x8] sm:$0xff]
    %v18 = vld [vmem:[%s0 + $0x10] sm:$0xff]
    %v19 = vld [vmem:[%s0 + $0x18] sm:$0xff]
    %v20 = vld [vmem:[%s0 + $0x20] sm:$0xff]
    %v21 = vld [vmem:[%s0 + $0x28] sm:$0xff]
    %v22 = vld [vmem:[%s1] sm:$0xf]
    %v23 = vld [vmem:[%s1 + $0x4] sm:$0xf]
    %v24 = vld [vmem:[%s1 + $0x8] sm:$0xf]
    %v25 = vld [vmem:[%s1 + $0xc] sm:$0xf]
    %v26 = vld [vmem:[%s1 + $0x10] sm:$0xf]
    %v27 = vld [vmem:[%s1 + $0x14] sm:$0xf]
    %v28 = vld [vmem:[%s1 + $0x18] sm:$0xf]
    %v29 = vld [vmem:[%s1 + $0x1c] sm:$0xf]
    %v30 = vld [vmem:[%s1 + $0x20] sm:$0xf]
    %v31 = vld [vmem:[%s1 + $0x24] sm:$0xf]
    %v32 = vld [vmem:[%s1 + $0x28] sm:$0xf]
    %v33 = vld [vmem:[%s1 + $0x2c] sm:$0xf]
    %v34 = vld [vmem:[%s1 + $0x30] sm:$0xf]
    %v35 = vld [vmem:[%s1 + $0x34] sm:$0xf]
    %v36 = vld [vmem:[%s1 + $0x38] sm:$0xf]
    %v37 = vld [vmem:[%s1 + $0x3c] sm:$0xf]
    %v38 = vld [vmem:[%s1 + $0x40] sm:$0xf]
    %v39 = vld [vmem:[%s1 + $0x44] sm:$0xf]
    %v40 = vld [vmem:[%s1 + $0x48] sm:$0xf]
    %v41 = vld [vmem:[%s1 + $0x4c] sm:$0xf]
    %v42 = vld [vmem:[%s1 + $0x50] sm:$0xf]
    %v43 = vld [vmem:[%s1 + $0x54] sm:$0xf]
    %v44 = vld [vmem:[%s1 + $0x58] sm:$0xf]
    %v45 = vld [vmem:[%s1 + $0x5c] sm:$0xf]
    %v46 = vld [vmem:[%s1 + $0x60] sm:$0xf]
    %v47 = vld [vmem:[%s1 + $0x64] sm:$0xf]
    %v48 = vld [vmem:[%s1 + $0x68] sm:$0xf]
    %v49 = vld [vmem:[%s1 + $0x6c] sm:$0xf]
    %v50 = vld [vmem:[%s1 + $0x70] sm:$0xf]
    %v51 = vld [vmem:[%s1 + $0x74] sm:$0xf]
    %v52 = vld [vmem:[%s1 + $0x78] sm:$0xf]
    %v53 = vld [vmem:[%s1 + $0x7c] sm:$0xf]
    %v54 = vld [vmem:[%s1 + $0x80] sm:$0xf]
    %v55 = vld [vmem:[%s1 + $0x84] sm:$0xf]
    %v56 = vld [vmem:[%s1 + $0x88] sm:$0xf]
    %v57 = vld [vmem:[%s1 + $0x8c] sm:$0xf]
    %v58 = vld [vmem:[%s1 + $0x90] sm:$0xf]
    %v59 = vld [vmem:[%s1 + $0x94] sm:$0xf]
    %v60 = vld [vmem:[%s1 + $0x98] sm:$0xf]
    %v61 = vld [vmem:[%s1 + $0x9c] sm:$0xf]
    %v62 = vld [vmem:[%s1 + $0xa0] sm:$0xf]
    %v63 = vld [vmem:[%s1 + $0xa4] sm:$0xf]
    %v64 = vld [vmem:[%s1 + $0xa8] sm:$0xf]
    %v65 = vld [vmem:[%s1 + $0xac] sm:$0xf]
    %v66 = vld [vmem:[%s1 + $0xb0] sm:$0xf]
    %v67 = vld [vmem:[%s1 + $0xb4] sm:$0xf]
    %v68 = vld [vmem:[%s1 + $0xb8] sm:$0xf]
    %v69 = vld [vmem:[%s1 + $0xbc] sm:$0xf]
    %v70 = vld [vmem:[%s1 + $0xc0] sm:$0xf]
    %v71 = vld [vmem:[%s1 + $0xc4] sm:$0xf]
    %v72 = vld [vmem:[%s1 + $0xc8] sm:$0xf]
    %v73 = vld [vmem:[%s1 + $0xcc] sm:$0xf]
    %v74 = vld [vmem:[%s1 + $0xd0] sm:$0xf]
    %v75 = vld [vmem:[%s1 + $0xd4] sm:$0xf]
    %v76 = vld [vmem:[%s1 + $0xd8] sm:$0xf]
    %v77 = vld [vmem:[%s1 + $0xdc] sm:$0xf]
    %v78 = vld [vmem:[%s1 + $0xe0] sm:$0xf]
    %v79 = vld [vmem:[%s1 + $0xe4] sm:$0xf]
    %v80 = vld [vmem:[%s1 + $0xe8] sm:$0xf]
    %v81 = vld [vmem:[%s1 + $0xec] sm:$0xf]
    %v82 = vld [vmem:[%s1 + $0xf0] sm:$0xf]
    %v83 = vld [vmem:[%s1 + $0xf4] sm:$0xf]
    %v84 = vld [vmem:[%s1 + $0xf8] sm:$0xf]
    %v85 = vld [vmem:[%s1 + $0xfc] sm:$0xf]
    %v86 = vld [vmem:[%s1 + $0x100] sm:$0xf]
    %v87 = vld [vmem:[%s1 + $0x104] sm:$0xf]
    %v88 = vld [vmem:[%s1 + $0x108] sm:$0xf]
    %v89 = vld [vmem:[%s1 + $0x10c] sm:$0xf]
    %v90 = vld [vmem:[%s1 + $0x110] sm:$0xf]
    %v91 = vld [vmem:[%s1 + $0x114] sm:$0xf]
    %v92 = vld [vmem:[%s1 + $0x118] sm:$0xf]
    %v93 = vld [vmem:[%s1 + $0x11c] sm:$0xf]
    %v94 = vld [vmem:[%s1 + $0x120] sm:$0xf]
    %v95 = vld [vmem:[%s1 + $0x124] sm:$0xf]
    %v96 = vld [vmem:[%s1 + $0x128] sm:$0xf]
    %v97 = vld [vmem:[%s1 + $0x12c] sm:$0xf]
    %v98 = vld [vmem:[%s1 + $0x130] sm:$0xf]
    %v99 = vld [vmem:[%s1 + $0x134] sm:$0xf]
    %v100 = vld [vmem:[%s1 + $0x138] sm:$0xf]
    %v101 = vld [vmem:[%s1 + $0x13c] sm:$0xf]
    %v102 = vld [vmem:[%s1 + $0x140] sm:$0xf]
    %v103 = vld [vmem:[%s1 + $0x144] sm:$0xf]
    %v104 = vld [vmem:[%s1 + $0x148] sm:$0xf]
    %v105 = vld [vmem:[%s1 + $0x14c] sm:$0xf]
    %v106 = vld [vmem:[%s1 + $0x150] sm:$0xf]
    %v107 = vld [vmem:[%s1 + $0x154] sm:$0xf]
    %v108 = vld [vmem:[%s1 + $0x158] sm:$0xf]
    %v109 = vld [vmem:[%s1 + $0x15c] sm:$0xf]
    %v110 = vld [vmem:[%s1 + $0x160] sm:$0xf]
    %v111 = vld [vmem:[%s1 + $0x164] sm:$0xf]
    %v112 = vld [vmem:[%s1 + $0x168] sm:$0xf]
    %v113 = vld [vmem:[%s1 + $0x16c] sm:$0xf]
    %v114 = vld [vmem:[%s1 + $0x170] sm:$0xf]
    %v115 = vld [vmem:[%s1 + $0x174] sm:$0xf]
    %v116 = vld [vmem:[%s1 + $0x178] sm:$0xf]
    %v117 = vld [vmem:[%s1 + $0x17c] sm:$0xf]
    %v118 = vld [vmem:[%s2] sm:$0x1]
    %v120 = vlaneseq
    %v121 = vshrl.u32 %v120, 7
    %v122 = vsub.s32 0, %v121
    %v123 = vrot.slane %v118, %v122
    %v131 = vunpack.c.l.b16 %v16
    %v132 = vunpack.c.h.b16 %v16
    %v133 = vunpack.c.l.b16 %v17
    %v134 = vunpack.c.h.b16 %v17
    %v135 = vunpack.c.l.b16 %v18
    %v136 = vunpack.c.h.b16 %v18
    %v137 = vunpack.c.l.b16 %v19
    %v138 = vunpack.c.h.b16 %v19
    %v139 = vunpack.c.l.b16 %v20
    %v140 = vunpack.c.h.b16 %v20
    %v141 = vunpack.c.l.b16 %v21
    %v142 = vunpack.c.h.b16 %v21
    %v143 = vpack.c.b16 %v137, %v131
    %v144 = vpack.c.b16 %v138, %v132
    %v145 = vpack.c.b16 %v139, %v133
    %v146 = vpack.c.b16 %v140, %v134
    %v147 = vpack.c.b16 %v141, %v135
    %v148 = vpack.c.b16 %v142, %v136
    %v251 = vunpack.c.l.b16 %v22
    %v252 = vunpack.c.l.b16 %v23
    %v253 = vunpack.c.l.b16 %v24
    %v254 = vunpack.c.l.b16 %v25
    %v255 = vunpack.c.l.b16 %v26
    %v256 = vunpack.c.l.b16 %v27
    %v257 = vunpack.c.l.b16 %v28
    %v258 = vunpack.c.l.b16 %v29
    %v259 = vunpack.c.l.b16 %v30
    %v260 = vunpack.c.l.b16 %v31
    %v261 = vunpack.c.l.b16 %v32
    %v262 = vunpack.c.l.b16 %v33
    %v263 = vunpack.c.l.b16 %v34
    %v264 = vunpack.c.l.b16 %v35
    %v265 = vunpack.c.l.b16 %v36
    %v266 = vunpack.c.l.b16 %v37
    %v267 = vunpack.c.l.b16 %v38
    %v268 = vunpack.c.l.b16 %v39
    %v269 = vunpack.c.l.b16 %v40
    %v270 = vunpack.c.l.b16 %v41
    %v271 = vunpack.c.l.b16 %v42
    %v272 = vunpack.c.l.b16 %v43
    %v273 = vunpack.c.l.b16 %v44
    %v274 = vunpack.c.l.b16 %v45
    %v275 = vunpack.c.l.b16 %v46
    %v276 = vunpack.c.l.b16 %v47
    %v277 = vunpack.c.l.b16 %v48
    %v278 = vunpack.c.l.b16 %v49
    %v279 = vunpack.c.l.b16 %v50
    %v280 = vunpack.c.l.b16 %v51
    %v281 = vunpack.c.l.b16 %v52
    %v282 = vunpack.c.l.b16 %v53
    %v283 = vunpack.c.l.b16 %v54
    %v284 = vunpack.c.l.b16 %v55
    %v285 = vunpack.c.l.b16 %v56
    %v286 = vunpack.c.l.b16 %v57
    %v287 = vunpack.c.l.b16 %v58
    %v288 = vunpack.c.l.b16 %v59
    %v289 = vunpack.c.l.b16 %v60
    %v290 = vunpack.c.l.b16 %v61
    %v291 = vunpack.c.l.b16 %v62
    %v292 = vunpack.c.l.b16 %v63
    %v293 = vunpack.c.l.b16 %v64
    %v294 = vunpack.c.l.b16 %v65
    %v295 = vunpack.c.l.b16 %v66
    %v296 = vunpack.c.l.b16 %v67
    %v297 = vunpack.c.l.b16 %v68
    %v298 = vunpack.c.l.b16 %v69
    %v299 = vunpack.c.l.b16 %v70
    %v300 = vunpack.c.l.b16 %v71
    %v301 = vunpack.c.l.b16 %v72
    %v302 = vunpack.c.l.b16 %v73
    %v303 = vunpack.c.l.b16 %v74
    %v304 = vunpack.c.l.b16 %v75
    %v305 = vunpack.c.l.b16 %v76
    %v306 = vunpack.c.l.b16 %v77
    %v307 = vunpack.c.l.b16 %v78
    %v308 = vunpack.c.l.b16 %v79
    %v309 = vunpack.c.l.b16 %v80
    %v310 = vunpack.c.l.b16 %v81
    %v311 = vunpack.c.l.b16 %v82
    %v312 = vunpack.c.l.b16 %v83
    %v313 = vunpack.c.l.b16 %v84
    %v314 = vunpack.c.l.b16 %v85
    %v315 = vunpack.c.l.b16 %v86
    %v316 = vunpack.c.l.b16 %v87
    %v317 = vunpack.c.l.b16 %v88
    %v318 = vunpack.c.l.b16 %v89
    %v319 = vunpack.c.l.b16 %v90
    %v320 = vunpack.c.l.b16 %v91
    %v321 = vunpack.c.l.b16 %v92
    %v322 = vunpack.c.l.b16 %v93
    %v323 = vunpack.c.l.b16 %v94
    %v324 = vunpack.c.l.b16 %v95
    %v325 = vunpack.c.l.b16 %v96
    %v326 = vunpack.c.l.b16 %v97
    %v327 = vunpack.c.l.b16 %v98
    %v328 = vunpack.c.l.b16 %v99
    %v329 = vunpack.c.l.b16 %v100
    %v330 = vunpack.c.l.b16 %v101
    %v331 = vunpack.c.l.b16 %v102
    %v332 = vunpack.c.l.b16 %v103
    %v333 = vunpack.c.l.b16 %v104
    %v334 = vunpack.c.l.b16 %v105
    %v335 = vunpack.c.l.b16 %v106
    %v336 = vunpack.c.l.b16 %v107
    %v337 = vunpack.c.l.b16 %v108
    %v338 = vunpack.c.l.b16 %v109
    %v339 = vunpack.c.l.b16 %v110
    %v340 = vunpack.c.l.b16 %v111
    %v341 = vunpack.c.l.b16 %v112
    %v342 = vunpack.c.l.b16 %v113
    %v343 = vunpack.c.l.b16 %v114
    %v344 = vunpack.c.l.b16 %v115
    %v345 = vunpack.c.l.b16 %v116
    %v346 = vunpack.c.l.b16 %v117
    %v347 = vpack.c.b16 %v252, %v251
    %v348 = vpack.c.b16 %v254, %v253
    %v349 = vpack.c.b16 %v256, %v255
    %v350 = vpack.c.b16 %v258, %v257
    %v351 = vpack.c.b16 %v260, %v259
    %v352 = vpack.c.b16 %v262, %v261
    %v353 = vpack.c.b16 %v264, %v263
    %v354 = vpack.c.b16 %v266, %v265
    %v355 = vpack.c.b16 %v268, %v267
    %v356 = vpack.c.b16 %v270, %v269
    %v357 = vpack.c.b16 %v272, %v271
    %v358 = vpack.c.b16 %v274, %v273
    %v359 = vpack.c.b16 %v276, %v275
    %v360 = vpack.c.b16 %v278, %v277
    %v361 = vpack.c.b16 %v280, %v279
    %v362 = vpack.c.b16 %v282, %v281
    %v363 = vpack.c.b16 %v284, %v283
    %v364 = vpack.c.b16 %v286, %v285
    %v365 = vpack.c.b16 %v288, %v287
    %v366 = vpack.c.b16 %v290, %v289
    %v367 = vpack.c.b16 %v292, %v291
    %v368 = vpack.c.b16 %v294, %v293
    %v369 = vpack.c.b16 %v296, %v295
    %v370 = vpack.c.b16 %v298, %v297
    %v371 = vpack.c.b16 %v300, %v299
    %v372 = vpack.c.b16 %v302, %v301
    %v373 = vpack.c.b16 %v304, %v303
    %v374 = vpack.c.b16 %v306, %v305
    %v375 = vpack.c.b16 %v308, %v307
    %v376 = vpack.c.b16 %v310, %v309
    %v377 = vpack.c.b16 %v312, %v311
    %v378 = vpack.c.b16 %v314, %v313
    %v379 = vpack.c.b16 %v316, %v315
    %v380 = vpack.c.b16 %v318, %v317
    %v381 = vpack.c.b16 %v320, %v319
    %v382 = vpack.c.b16 %v322, %v321
    %v383 = vpack.c.b16 %v324, %v323
    %v384 = vpack.c.b16 %v326, %v325
    %v385 = vpack.c.b16 %v328, %v327
    %v386 = vpack.c.b16 %v330, %v329
    %v387 = vpack.c.b16 %v332, %v331
    %v388 = vpack.c.b16 %v334, %v333
    %v389 = vpack.c.b16 %v336, %v335
    %v390 = vpack.c.b16 %v338, %v337
    %v391 = vpack.c.b16 %v340, %v339
    %v392 = vpack.c.b16 %v342, %v341
    %v393 = vpack.c.b16 %v344, %v343
    %v394 = vpack.c.b16 %v346, %v345
    %443 = vmatprep.subr.bf16.mxu0 0
    %444 = vmatpush1.bf16.msra.mxu0 %v354
    %445 = vmatprep.subr.bf16.mxu0 0
    %446 = vmatpush1.bf16.msra.mxu0 %v353
    %447 = vmatprep.subr.bf16.mxu0 0
    %448 = vmatpush1.bf16.msra.mxu0 %v352
    %449 = vmatprep.subr.bf16.mxu0 0
    %450 = vmatpush1.bf16.msra.mxu0 %v351
    %451 = vmatprep.subr.bf16.mxu0 0
    %452 = vmatpush1.bf16.msra.mxu0 %v350
    %453 = vmatprep.subr.bf16.mxu0 0
    %454 = vmatpush1.bf16.msra.mxu0 %v349
    %455 = vmatprep.subr.bf16.mxu0 0
    %456 = vmatpush1.bf16.msra.mxu0 %v348
    %457 = vmatprep.subr.bf16.mxu0 0
    %458 = vmatpush1.bf16.msra.mxu0 %v347
    %459 = vmatprep.subr.bf16.mxu0 0
    %460 = vmatpush2.bf16.msra.mxu0 %v362
    %461 = vmatprep.subr.bf16.mxu0 0
    %462 = vmatpush2.bf16.msra.mxu0 %v361
    %463 = vmatprep.subr.bf16.mxu0 0
    %464 = vmatpush2.bf16.msra.mxu0 %v360
    %465 = vmatprep.subr.bf16.mxu0 0
    %466 = vmatpush2.bf16.msra.mxu0 %v359
    %467 = vmatprep.subr.bf16.mxu0 0
    %468 = vmatpush2.bf16.msra.mxu0 %v358
    %469 = vmatprep.subr.bf16.mxu0 0
    %470 = vmatpush2.bf16.msra.mxu0 %v357
    %471 = vmatprep.subr.bf16.mxu0 0
    %472 = vmatpush2.bf16.msra.mxu0 %v356
    %473 = vmatprep.subr.bf16.mxu0 0
    %474 = vmatpush2.bf16.msra.mxu0 %v355
    %475 = vmatprep.mubr.bf16.mxu0 %v144
    %476 = vmatmul.mubr.bf16.gmra.mxu0 %v143
    %v477 = vpop.f32.mrf.mxu0
    %v478 = vadd.f32 %v123, %v477
    %v479 = vpop.f32.mrf.mxu0
    %v480 = vpop.f32.mrf.mxu0
    %v481 = vadd.f32 %v123, %v480
    %v482 = vpop.f32.mrf.mxu0
    %483 = vdwg.mxu0
    %484 = vmatprep.subr.bf16.mxu0 0
    %485 = vmatpush1.bf16.msra.mxu0 %v370
    %486 = vmatprep.subr.bf16.mxu0 0
    %487 = vmatpush1.bf16.msra.mxu0 %v369
    %488 = vmatprep.subr.bf16.mxu0 0
    %489 = vmatpush1.bf16.msra.mxu0 %v368
    %490 = vmatprep.subr.bf16.mxu0 0
    %491 = vmatpush1.bf16.msra.mxu0 %v367
    %492 = vmatprep.subr.bf16.mxu0 0
    %493 = vmatpush1.bf16.msra.mxu0 %v366
    %494 = vmatprep.subr.bf16.mxu0 0
    %495 = vmatpush1.bf16.msra.mxu0 %v365
    %496 = vmatprep.subr.bf16.mxu0 0
    %497 = vmatpush1.bf16.msra.mxu0 %v364
    %498 = vmatprep.subr.bf16.mxu0 0
    %499 = vmatpush1.bf16.msra.mxu0 %v363
    %500 = vmatprep.subr.bf16.mxu0 0
    %501 = vmatpush2.bf16.msra.mxu0 %v378
    %502 = vmatprep.subr.bf16.mxu0 0
    %503 = vmatpush2.bf16.msra.mxu0 %v377
    %504 = vmatprep.subr.bf16.mxu0 0
    %505 = vmatpush2.bf16.msra.mxu0 %v376
    %506 = vmatprep.subr.bf16.mxu0 0
    %507 = vmatpush2.bf16.msra.mxu0 %v375
    %508 = vmatprep.subr.bf16.mxu0 0
    %509 = vmatpush2.bf16.msra.mxu0 %v374
    %510 = vmatprep.subr.bf16.mxu0 0
    %511 = vmatpush2.bf16.msra.mxu0 %v373
    %512 = vmatprep.subr.bf16.mxu0 0
    %513 = vmatpush2.bf16.msra.mxu0 %v372
    %514 = vmatprep.subr.bf16.mxu0 0
    %515 = vmatpush2.bf16.msra.mxu0 %v371
    %516 = vmatprep.mubr.bf16.mxu0 %v146
    %517 = vmatmul.mubr.bf16.gmra.mxu0 %v145
    %v518 = vpop.f32.mrf.mxu0
    %v519 = vadd.f32 %v478, %v518
    %v520 = vpop.f32.mrf.mxu0
    %v521 = vpop.f32.mrf.mxu0
    %v522 = vadd.f32 %v481, %v521
    %v523 = vpop.f32.mrf.mxu0
    %524 = vdwg.mxu0
    %525 = vmatprep.subr.bf16.mxu0 0
    %526 = vmatpush1.bf16.msra.mxu0 %v386
    %527 = vmatprep.subr.bf16.mxu0 0
    %528 = vmatpush1.bf16.msra.mxu0 %v385
    %529 = vmatprep.subr.bf16.mxu0 0
    %530 = vmatpush1.bf16.msra.mxu0 %v384
    %531 = vmatprep.subr.bf16.mxu0 0
    %532 = vmatpush1.bf16.msra.mxu0 %v383
    %533 = vmatprep.subr.bf16.mxu0 0
    %534 = vmatpush1.bf16.msra.mxu0 %v382
    %535 = vmatprep.subr.bf16.mxu0 0
    %536 = vmatpush1.bf16.msra.mxu0 %v381
    %537 = vmatprep.subr.bf16.mxu0 0
    %538 = vmatpush1.bf16.msra.mxu0 %v380
    %539 = vmatprep.subr.bf16.mxu0 0
    %540 = vmatpush1.bf16.msra.mxu0 %v379
    %541 = vmatprep.subr.bf16.mxu0 0
    %542 = vmatpush2.bf16.msra.mxu0 %v394
    %543 = vmatprep.subr.bf16.mxu0 0
    %544 = vmatpush2.bf16.msra.mxu0 %v393
    %545 = vmatprep.subr.bf16.mxu0 0
    %546 = vmatpush2.bf16.msra.mxu0 %v392
    %547 = vmatprep.subr.bf16.mxu0 0
    %548 = vmatpush2.bf16.msra.mxu0 %v391
    %549 = vmatprep.subr.bf16.mxu0 0
    %550 = vmatpush2.bf16.msra.mxu0 %v390
    %551 = vmatprep.subr.bf16.mxu0 0
    %552 = vmatpush2.bf16.msra.mxu0 %v389
    %553 = vmatprep.subr.bf16.mxu0 0
    %554 = vmatpush2.bf16.msra.mxu0 %v388
    %555 = vmatprep.subr.bf16.mxu0 0
    %556 = vmatpush2.bf16.msra.mxu0 %v387
    %557 = vmatprep.mubr.bf16.mxu0 %v148
    %558 = vmatmul.mubr.bf16.gmra.mxu0 %v147
    %v559 = vpop.f32.mrf.mxu0
    %v560 = vadd.f32 %v519, %v559
    %v561 = vpop.f32.mrf.mxu0
    %v562 = vpop.f32.mrf.mxu0
    %v563 = vadd.f32 %v522, %v562
    %v564 = vpop.f32.mrf.mxu0
    %565 = vdwg.mxu0
    %v566 = vmul.f32 %v560, 50.0
    %v567 = vmul.f32 %v563, 50.0
    %569 = vrot.lane.b32.xlu0 %v567, 64
    %v570 = vpop.permute.xlu0 %569
    %vm572 = vcmask 523264
    %v573 = vsel %vm572, %v566, %v570
    %574 = vst [vmem:[#allocation2] sm:$0xff] %v573
    %v575 = vlaneseq
    %v576 = vshrl.u32 %v575, 7
    %v577 = vadd.s32 %v576, 8
    %v578 = vadd.s32 %v576, 16
    %v579 = vadd.s32 %v576, 24
    %v580 = vadd.s32 %v576, 32
    %v581 = vadd.s32 %v576, 40
    %v582 = vadd.s32 %v576, 48
    %v583 = vadd.s32 %v576, 56
    %v584 = vcvt.s32.f32 %v576
    %v585 = vcvt.s32.f32 %v577
    %v586 = vcvt.s32.f32 %v578
    %v587 = vcvt.s32.f32 %v579
    %v588 = vcvt.s32.f32 %v580
    %v589 = vcvt.s32.f32 %v581
    %v590 = vcvt.s32.f32 %v582
    %v591 = vcvt.s32.f32 %v583
    %v592 = vmul.f32 %v584, 0.034920637
    %v593 = vmul.f32 %v585, 0.034920637
    %v594 = vmul.f32 %v586, 0.034920637
    %v595 = vmul.f32 %v587, 0.034920637
    %v596 = vmul.f32 %v588, 0.034920637
    %v597 = vmul.f32 %v589, 0.034920637
    %v598 = vmul.f32 %v590, 0.034920637
    %v599 = vmul.f32 %v591, 0.034920637
    %v600 = vsub.f32 %v592, 1.1
    %v601 = vsub.f32 %v593, 1.1
    %v602 = vsub.f32 %v594, 1.1
    %v603 = vsub.f32 %v595, 1.1
    %v604 = vsub.f32 %v596, 1.1
    %v605 = vsub.f32 %v597, 1.1
    %v606 = vsub.f32 %v598, 1.1
    %v607 = vsub.f32 %v599, 1.1
    %v608 = vmul.f32 %v600, 50.0
    %v609 = vmul.f32 %v601, 50.0
    %v610 = vmul.f32 %v602, 50.0
    %v611 = vmul.f32 %v603, 50.0
    %v612 = vmul.f32 %v604, 50.0
    %v613 = vmul.f32 %v605, 50.0
    %v614 = vmul.f32 %v606, 50.0
    %v615 = vmul.f32 %v607, 50.0
    %v616 = vld [vmem:[#allocation2] sm:$0x1]
    %v617 = vlaneseq
    %v618 = vshrl.u32 %v617, 7
    %v619 = vsub.s32 0, %v618
    %v620 = vrot.slane %v616, %v619
    %v621 = vsub.f32 %v608, %v620
    %v622 = vsub.f32 %v609, %v620
    %v623 = vsub.f32 %v610, %v620
    %v624 = vsub.f32 %v611, %v620
    %v625 = vsub.f32 %v612, %v620
    %v626 = vsub.f32 %v613, %v620
    %v627 = vsub.f32 %v614, %v620
    %v628 = vsub.f32 %v615, %v620
    %v629 = vtanh.pop %v621
    %v630 = vtanh.pop %v622
    %v631 = vtanh.pop %v623
    %v632 = vtanh.pop %v624
    %v633 = vtanh.pop %v625
    %v634 = vtanh.pop %v626
    %v635 = vtanh.pop %v627
    %v636 = vtanh.pop %v628
    %v637 = vadd.f32 %v629, 0.0
    %v638 = vadd.f32 %v630, 0.0
    %v639 = vadd.f32 %v631, 0.0
    %v640 = vadd.f32 %v632, 0.0
    %v641 = vadd.f32 %v633, 0.0
    %v642 = vadd.f32 %v634, 0.0
    %v643 = vadd.f32 %v635, 0.0
    %v644 = vadd.f32 %v636, 0.0
    %v645 = vld [vmem:[#allocation2 + $0x1] sm:$0x1]
    %v646 = vlaneseq
    %v647 = vshrl.u32 %v646, 7
    %v648 = vsub.s32 0, %v647
    %v649 = vrot.slane %v645, %v648
    %v650 = vsub.f32 %v608, %v649
    %v651 = vsub.f32 %v609, %v649
    %v652 = vsub.f32 %v610, %v649
    %v653 = vsub.f32 %v611, %v649
    %v654 = vsub.f32 %v612, %v649
    %v655 = vsub.f32 %v613, %v649
    %v656 = vsub.f32 %v614, %v649
    %v657 = vsub.f32 %v615, %v649
    %v658 = vtanh.pop %v650
    %v659 = vtanh.pop %v651
    %v660 = vtanh.pop %v652
    %v661 = vtanh.pop %v653
    %v662 = vtanh.pop %v654
    %v663 = vtanh.pop %v655
    %v664 = vtanh.pop %v656
    %v665 = vtanh.pop %v657
    %v666 = vadd.f32 %v637, %v658
    %v667 = vadd.f32 %v638, %v659
    %v668 = vadd.f32 %v639, %v660
    %v669 = vadd.f32 %v640, %v661
    %v670 = vadd.f32 %v641, %v662
    %v671 = vadd.f32 %v642, %v663
    %v672 = vadd.f32 %v643, %v664
    %v673 = vadd.f32 %v644, %v665
    %v674 = vld [vmem:[#allocation2 + $0x2] sm:$0x1]
    %v675 = vlaneseq
    %v676 = vshrl.u32 %v675, 7
    %v677 = vsub.s32 0, %v676
    %v678 = vrot.slane %v674, %v677
    %v679 = vsub.f32 %v608, %v678
    %v680 = vsub.f32 %v609, %v678
    %v681 = vsub.f32 %v610, %v678
    %v682 = vsub.f32 %v611, %v678
    %v683 = vsub.f32 %v612, %v678
    %v684 = vsub.f32 %v613, %v678
    %v685 = vsub.f32 %v614, %v678
    %v686 = vsub.f32 %v615, %v678
    %v687 = vtanh.pop %v679
    %v688 = vtanh.pop %v680
    %v689 = vtanh.pop %v681
    %v690 = vtanh.pop %v682
    %v691 = vtanh.pop %v683
    %v692 = vtanh.pop %v684
    %v693 = vtanh.pop %v685
    %v694 = vtanh.pop %v686
    %v695 = vadd.f32 %v666, %v687
    %v696 = vadd.f32 %v667, %v688
    %v697 = vadd.f32 %v668, %v689
    %v698 = vadd.f32 %v669, %v690
    %v699 = vadd.f32 %v670, %v691
    %v700 = vadd.f32 %v671, %v692
    %v701 = vadd.f32 %v672, %v693
    %v702 = vadd.f32 %v673, %v694
    %v703 = vld [vmem:[#allocation2 + $0x3] sm:$0x1]
    %v704 = vlaneseq
    %v705 = vshrl.u32 %v704, 7
    %v706 = vsub.s32 0, %v705
    %v707 = vrot.slane %v703, %v706
    %v708 = vsub.f32 %v608, %v707
    %v709 = vsub.f32 %v609, %v707
    %v710 = vsub.f32 %v610, %v707
    %v711 = vsub.f32 %v611, %v707
    %v712 = vsub.f32 %v612, %v707
    %v713 = vsub.f32 %v613, %v707
    %v714 = vsub.f32 %v614, %v707
    %v715 = vsub.f32 %v615, %v707
    %v716 = vtanh.pop %v708
    %v717 = vtanh.pop %v709
    %v718 = vtanh.pop %v710
    %v719 = vtanh.pop %v711
    %v720 = vtanh.pop %v712
    %v721 = vtanh.pop %v713
    %v722 = vtanh.pop %v714
    %v723 = vtanh.pop %v715
    %v724 = vadd.f32 %v695, %v716
    %v725 = vadd.f32 %v696, %v717
    %v726 = vadd.f32 %v697, %v718
    %v727 = vadd.f32 %v698, %v719
    %v728 = vadd.f32 %v699, %v720
    %v729 = vadd.f32 %v700, %v721
    %v730 = vadd.f32 %v701, %v722
    %v731 = vadd.f32 %v702, %v723
    %v732 = vld [vmem:[#allocation2 + $0x4] sm:$0x1]
    %v733 = vlaneseq
    %v734 = vshrl.u32 %v733, 7
    %v735 = vsub.s32 0, %v734
    %v736 = vrot.slane %v732, %v735
    %v737 = vsub.f32 %v608, %v736
    %v738 = vsub.f32 %v609, %v736
    %v739 = vsub.f32 %v610, %v736
    %v740 = vsub.f32 %v611, %v736
    %v741 = vsub.f32 %v612, %v736
    %v742 = vsub.f32 %v613, %v736
    %v743 = vsub.f32 %v614, %v736
    %v744 = vsub.f32 %v615, %v736
    %v745 = vtanh.pop %v737
    %v746 = vtanh.pop %v738
    %v747 = vtanh.pop %v739
    %v748 = vtanh.pop %v740
    %v749 = vtanh.pop %v741
    %v750 = vtanh.pop %v742
    %v751 = vtanh.pop %v743
    %v752 = vtanh.pop %v744
    %v753 = vadd.f32 %v724, %v745
    %v754 = vadd.f32 %v725, %v746
    %v755 = vadd.f32 %v726, %v747
    %v756 = vadd.f32 %v727, %v748
    %v757 = vadd.f32 %v728, %v749
    %v758 = vadd.f32 %v729, %v750
    %v759 = vadd.f32 %v730, %v751
    %v760 = vadd.f32 %v731, %v752
    %v761 = vld [vmem:[#allocation2 + $0x5] sm:$0x1]
    %v762 = vlaneseq
    %v763 = vshrl.u32 %v762, 7
    %v764 = vsub.s32 0, %v763
    %v765 = vrot.slane %v761, %v764
    %v766 = vsub.f32 %v608, %v765
    %v767 = vsub.f32 %v609, %v765
    %v768 = vsub.f32 %v610, %v765
    %v769 = vsub.f32 %v611, %v765
    %v770 = vsub.f32 %v612, %v765
    %v771 = vsub.f32 %v613, %v765
    %v772 = vsub.f32 %v614, %v765
    %v773 = vsub.f32 %v615, %v765
    %v774 = vtanh.pop %v766
    %v775 = vtanh.pop %v767
    %v776 = vtanh.pop %v768
    %v777 = vtanh.pop %v769
    %v778 = vtanh.pop %v770
    %v779 = vtanh.pop %v771
    %v780 = vtanh.pop %v772
    %v781 = vtanh.pop %v773
    %v782 = vadd.f32 %v753, %v774
    %v783 = vadd.f32 %v754, %v775
    %v784 = vadd.f32 %v755, %v776
    %v785 = vadd.f32 %v756, %v777
    %v786 = vadd.f32 %v757, %v778
    %v787 = vadd.f32 %v758, %v779
    %v788 = vadd.f32 %v759, %v780
    %v789 = vadd.f32 %v760, %v781
    %v790 = vld [vmem:[#allocation2 + $0x6] sm:$0x1]
    %v791 = vlaneseq
    %v792 = vshrl.u32 %v791, 7
    %v793 = vsub.s32 0, %v792
    %v794 = vrot.slane %v790, %v793
    %v795 = vsub.f32 %v608, %v794
    %v796 = vsub.f32 %v609, %v794
    %v797 = vsub.f32 %v610, %v794
    %v798 = vsub.f32 %v611, %v794
    %v799 = vsub.f32 %v612, %v794
    %v800 = vsub.f32 %v613, %v794
    %v801 = vsub.f32 %v614, %v794
    %v802 = vsub.f32 %v615, %v794
    %v803 = vtanh.pop %v795
    %v804 = vtanh.pop %v796
    %v805 = vtanh.pop %v797
    %v806 = vtanh.pop %v798
    %v807 = vtanh.pop %v799
    %v808 = vtanh.pop %v800
    %v809 = vtanh.pop %v801
    %v810 = vtanh.pop %v802
    %v811 = vadd.f32 %v782, %v803
    %v812 = vadd.f32 %v783, %v804
    %v813 = vadd.f32 %v784, %v805
    %v814 = vadd.f32 %v785, %v806
    %v815 = vadd.f32 %v786, %v807
    %v816 = vadd.f32 %v787, %v808
    %v817 = vadd.f32 %v788, %v809
    %v818 = vadd.f32 %v789, %v810
    %v819 = vld [vmem:[#allocation2 + $0x7] sm:$0x1]
    %v820 = vlaneseq
    %v821 = vshrl.u32 %v820, 7
    %v822 = vsub.s32 0, %v821
    %v823 = vrot.slane %v819, %v822
    %v824 = vsub.f32 %v608, %v823
    %v825 = vsub.f32 %v609, %v823
    %v826 = vsub.f32 %v610, %v823
    %v827 = vsub.f32 %v611, %v823
    %v828 = vsub.f32 %v612, %v823
    %v829 = vsub.f32 %v613, %v823
    %v830 = vsub.f32 %v614, %v823
    %v831 = vsub.f32 %v615, %v823
    %v832 = vtanh.pop %v824
    %v833 = vtanh.pop %v825
    %v834 = vtanh.pop %v826
    %v835 = vtanh.pop %v827
    %v836 = vtanh.pop %v828
    %v837 = vtanh.pop %v829
    %v838 = vtanh.pop %v830
    %v839 = vtanh.pop %v831
    %v840 = vadd.f32 %v811, %v832
    %v841 = vadd.f32 %v812, %v833
    %v842 = vadd.f32 %v813, %v834
    %v843 = vadd.f32 %v814, %v835
    %v844 = vadd.f32 %v815, %v836
    %v845 = vadd.f32 %v816, %v837
    %v846 = vadd.f32 %v817, %v838
    %v847 = vadd.f32 %v818, %v839
    %856 = vrot.lane.b32.xlu0 %v840, 64
    %v857 = vpop.permute.xlu0 %856
    %858 = vrot.lane.b32.xlu0 %v841, 64
    %v859 = vpop.permute.xlu0 %858
    %860 = vrot.lane.b32.xlu0 %v842, 64
    %v861 = vpop.permute.xlu0 %860
    %862 = vrot.lane.b32.xlu0 %v843, 64
    %v863 = vpop.permute.xlu0 %862
    %864 = vrot.lane.b32.xlu0 %v844, 64
    %v865 = vpop.permute.xlu0 %864
    %866 = vrot.lane.b32.xlu0 %v845, 64
    %v867 = vpop.permute.xlu0 %866
    %868 = vrot.lane.b32.xlu0 %v846, 64
    %v869 = vpop.permute.xlu0 %868
    %870 = vrot.lane.b32.xlu0 %v847, 64
    %v871 = vpop.permute.xlu0 %870
    %v880 = vadd.f32 %v840, %v857
    %v881 = vadd.f32 %v841, %v859
    %v882 = vadd.f32 %v842, %v861
    %v883 = vadd.f32 %v843, %v863
    %v884 = vadd.f32 %v844, %v865
    %v885 = vadd.f32 %v845, %v867
    %v886 = vadd.f32 %v846, %v869
    %v887 = vadd.f32 %v847, %v871
    %v888 = vmul.f32 %v880, 0.5
    %v889 = vmul.f32 %v881, 0.5
    %v890 = vmul.f32 %v882, 0.5
    %v891 = vmul.f32 %v883, 0.5
    %v892 = vmul.f32 %v884, 0.5
    %v893 = vmul.f32 %v885, 0.5
    %v894 = vmul.f32 %v886, 0.5
    %v895 = vmul.f32 %v887, 0.5
    %v896 = vadd.f32 %v888, 8.0
    %v897 = vadd.f32 %v889, 8.0
    %v898 = vadd.f32 %v890, 8.0
    %v899 = vadd.f32 %v891, 8.0
    %v900 = vadd.f32 %v892, 8.0
    %v901 = vadd.f32 %v893, 8.0
    %v902 = vadd.f32 %v894, 8.0
    %v903 = vadd.f32 %v895, 8.0
    %v904 = vsel %vm572, %v896, -inf
    %v905 = vsel %vm572, %v897, -inf
    %v906 = vsel %vm572, %v898, -inf
    %v907 = vsel %vm572, %v899, -inf
    %v908 = vsel %vm572, %v900, -inf
    %v909 = vmax.f32 %v904, %v908
    %v910 = vsel %vm572, %v901, -inf
    %v911 = vmax.f32 %v905, %v910
    %v912 = vsel %vm572, %v902, -inf
    %v913 = vmax.f32 %v906, %v912
    %v914 = vsel %vm572, %v903, -inf
    %v915 = vmax.f32 %v907, %v914
    %v916 = vmax.f32 %v909, %v911
    %v917 = vmax.f32 %v913, %v915
    %v918 = vmax.f32 %v916, %v917
    %919 = vmax.xlane.f32.xlu0 %v918
    %v920 = vpop.xlane.xlu0 %919
    %v921 = vrot.slane %v920, 4
    %v922 = vmax.f32 %v920, %v921
    %v923 = vrot.slane %v922, 2
    %v924 = vmax.f32 %v922, %v923
    %v925 = vrot.slane %v924, 1
    %v926 = vmax.f32 %v924, %v925
    %s927 = vtos %v926
    %v928 = vstv %s927
    %v929 = vrcp.pop %v928
    %s930 = vtos %v929
    %v931 = vstv %s930
    %v932 = vmul.f32 %v896, %v931
    %v933 = vmul.f32 %v897, %v931
    %v934 = vmul.f32 %v898, %v931
    %v935 = vmul.f32 %v899, %v931
    %v936 = vmul.f32 %v900, %v931
    %v937 = vmul.f32 %v901, %v931
    %v938 = vmul.f32 %v902, %v931
    %v939 = vmul.f32 %v903, %v931
    %940 = vst.msk [vmem:[#allocation3] sm:$0xff] %vm572, %v932
    %941 = vst.msk [vmem:[#allocation3 + $0x8] sm:$0xff] %vm572, %v933
    %942 = vst.msk [vmem:[#allocation3 + $0x10] sm:$0xff] %vm572, %v934
    %943 = vst.msk [vmem:[#allocation3 + $0x18] sm:$0xff] %vm572, %v935
    %944 = vst.msk [vmem:[#allocation3 + $0x20] sm:$0xff] %vm572, %v936
    %945 = vst.msk [vmem:[#allocation3 + $0x28] sm:$0xff] %vm572, %v937
    %946 = vst.msk [vmem:[#allocation3 + $0x30] sm:$0xff] %vm572, %v938
    %947 = vst.msk [vmem:[#allocation3 + $0x38] sm:$0xff] %vm572, %v939
    // Predicated region
    $region14: #{tpu_custom_call.1} parent=1 // pred_check
      _
    $region15: #{tpu_custom_call.1} parent=1 // pred_check_branch
      %949 = sbr.rel (0) target = $region17
    $region16: #{tpu_custom_call.1} parent=1 // pred_region
      %s951 = ssub.s32 1024, 1024
      %952 = vsyncadd [#allocation4], %s951
      %s953 = sshll.u32 [#allocation3], 4
      %s954 = int_to_ptr.vmem [resolvable:$true] %s953
      %959 = dma.vmem_to_hbm [thread:$0]  %s954, 1024, %s3, [#allocation4], 128, 128, 8
    $region17: #{tpu_custom_call.1} parent=1 // pred_fallthru
      _
    // Predicated region
    $region18: #{tpu_custom_call.1} parent=1 // pred_check
      _
    $region19: #{tpu_custom_call.1} parent=1 // pred_check_branch
      %961 = sbr.rel (0) target = $region21
    $region20: #{tpu_custom_call.1} parent=1 // pred_region
      %962 = dma.done [#allocation4], 1024
    $region21: #{tpu_custom_call.1} parent=1 // pred_fallthru
      _
    %963 = vsyncpa [#allocation4], 1

</llo_original>
